<compile_context>
chip_gen: v7x
topology: tpu7x:2x2x1
jax: 0.10.0
libtpu: 0.0.40
codegen_flags: <defaults>
</compile_context>

<pallas_src>
import jax
import jax.numpy as jnp
from jax.experimental import pallas as pl
from jax.experimental.pallas import tpu as pltpu
from functools import partial


def _layernorm_nobias_kernel(x_ref, w_ref, o_ref, *, eps, true_h):
    # x_ref: (row_tile, H_pad), w_ref: (1, H_pad), o_ref: (row_tile, H_pad)
    x = x_ref[...].astype(jnp.float32)
    # Both reductions issued before any dependent elementwise work (shorter XLU chain).
    s1 = jnp.sum(x, axis=-1, keepdims=True)
    s2 = jnp.sum(x * x, axis=-1, keepdims=True)
    inv_h = jnp.float32(1.0 / true_h)
    mean = s1 * inv_h
    var = jnp.maximum(s2 * inv_h - mean * mean, 0.0)   # biased variance (matches F.layer_norm)
    inv = jax.lax.rsqrt(var + jnp.float32(eps))
    w = w_ref[...].astype(jnp.float32)                 # (1, H_pad) broadcasts over rows
    o_ref[...] = ((x - mean) * inv * w).astype(o_ref.dtype)


def _round_up(n, m):
    return ((n + m - 1) // m) * m


def _pick_row_tile(rows, h_pad, dtype_bytes):
    """Largest sublane-aligned row tile that keeps double-buffered in+out blocks
    within a conservative VMEM budget that fits all generations (incl. v7x's 64 MiB)."""
    sub = 16 if dtype_bytes == 2 else 8           # bf16 packs 2 rows / sublane
    block_budget = 16 * 1024 * 1024               # bytes for 2 bufs x (in + out) blocks
    rt = block_budget // (4 * h_pad * dtype_bytes)
    rt = max(sub, (rt // sub) * sub)
    rt = min(rt, 1024)
    if rows >= 8 * sub:
        # keep >= ~8 grid steps so the grid can shard across v7x's 2 TCs and pipeline
        rt = min(rt, max(sub, _round_up(pl.cdiv(rows, 8), sub)))
    else:
        rt = min(rt, max(sub, _round_up(rows, sub)))
    return rt


def layernorm_without_bias(x, weight, eps=1e-05):
    """x: (..., H) array. weight: (H,). Normalizes over the last dim (weight only, no bias)."""
    H = x.shape[-1]
    assert weight.shape == (H,)
    orig_shape = x.shape

    x2 = x.reshape(-1, H)
    rows = x2.shape[0]
    dtype_bytes = jnp.dtype(x.dtype).itemsize

    # Lane-dense hidden dim: pad H up to a multiple of 128; padded weight lanes are zero.
    H_pad = max(128, _round_up(H, 128))
    if H_pad != H:
        x2 = jnp.pad(x2, ((0, 0), (0, H_pad - H)))
        w2 = jnp.pad(weight, (0, H_pad - H)).reshape(1, H_pad)
    else:
        w2 = weight.reshape(1, H_pad)

    # Row tiling: pad rows to a multiple of the tile (no whole-array fallback).
    row_tile = _pick_row_tile(rows, H_pad, dtype_bytes)
    rows_pad = _round_up(rows, row_tile)
    if rows_pad != rows:
        x2 = jnp.pad(x2, ((0, rows_pad - rows), (0, 0)))

    grid = (rows_pad // row_tile,)

    # Explicit scoped-VMEM limit (v5e defaults to 16 MiB); 32 MiB is safe on all gens.
    vmem_limit = 32 * 1024 * 1024

    out = pl.pallas_call(
        partial(_layernorm_nobias_kernel, eps=eps, true_h=H),
        out_shape=jax.ShapeDtypeStruct((rows_pad, H_pad), x.dtype),
        grid_spec=pltpu.PrefetchScalarGridSpec(
            num_scalar_prefetch=0,
            grid=grid,
            in_specs=[
                pl.BlockSpec((row_tile, H_pad), lambda i: (i, 0)),
                pl.BlockSpec((1, H_pad), lambda i: (0, 0)),
            ],
            out_specs=pl.BlockSpec((row_tile, H_pad), lambda i: (i, 0)),
        ),
        compiler_params=pltpu.CompilerParams(
            dimension_semantics=("parallel",),
            vmem_limit_bytes=vmem_limit,
        ),
    )(x2, w2)

    out = out[:rows, :H]
    return out.reshape(orig_shape)


def _reference_layernorm(x, weight, eps=1e-05):
    xf = x.astype(jnp.float32)
    mean = jnp.mean(xf, axis=-1, keepdims=True)
    var = jnp.mean((xf - mean) ** 2, axis=-1, keepdims=True)
    return ((xf - mean) * jax.lax.rsqrt(var + eps) * weight.astype(jnp.float32)).astype(x.dtype)


if __name__ == "__main__":
    key = jax.random.PRNGKey(0)
    batch, seq, hidden = 2, 8, 32

    x = jax.random.normal(key, (batch, seq, hidden), dtype=jnp.float32)
    # nn.Parameter(torch.ones(normalized_shape)) -> deterministic ones init
    weight = jnp.ones((hidden,), dtype=jnp.float32)

    y = layernorm_without_bias(x, weight, eps=1e-05)
    y = jax.block_until_ready(y)

    y_ref = _reference_layernorm(x, weight, eps=1e-05)
    assert y.shape == x.shape and y.dtype == x.dtype
    assert jnp.allclose(y, y_ref, atol=1e-5, rtol=1e-5)

    print("KERNEL_OK")
</pallas_src>

<mosaic_0001>
module attributes {stable_mosaic.version = 11 : i64} {
  func.func @_layernorm_nobias_kernel(%arg0: i32, %arg1: memref<16x128xf32, #tpu.memory_space<vmem>>, %arg2: memref<1x128xf32, #tpu.memory_space<vmem>>, %arg3: memref<16x128xf32, #tpu.memory_space<vmem>>) attributes {dimension_semantics = [#tpu.dimension_semantics<parallel>], iteration_bounds = array<i64: 1>, scalar_prefetch = 0 : i64, scratch_operands = 0 : i64, tpu.core_type = #tpu.core_type<tc>, window_params = [{transform_indices = @transform_0, window_bounds = array<i64: 16, 128>}, {pipeline_mode = #tpu.pipeline_mode<synchronous>, transform_indices = @transform_1, window_bounds = array<i64: 1, 128>}, {transform_indices = @transform_2, window_bounds = array<i64: 16, 128>}]} {
    %c0 = arith.constant 0 : index
    %c0_0 = arith.constant 0 : index
    %0 = vector.load %arg1[%c0, %c0_0] : memref<16x128xf32, #tpu.memory_space<vmem>>, vector<16x128xf32>
    %cst = arith.constant dense<0.000000e+00> : vector<16xf32>
    %1 = vector.multi_reduction <add>, %0, %cst [1] : vector<16x128xf32> to vector<16xf32>
    %2 = vector.shape_cast %1 : vector<16xf32> to vector<16x1xf32>
    %3 = arith.mulf %0, %0 : vector<16x128xf32>
    %cst_1 = arith.constant dense<0.000000e+00> : vector<16xf32>
    %4 = vector.multi_reduction <add>, %3, %cst_1 [1] : vector<16x128xf32> to vector<16xf32>
    %5 = vector.shape_cast %4 : vector<16xf32> to vector<16x1xf32>
    %cst_2 = arith.constant 3.125000e-02 : f32
    %6 = vector.broadcast %cst_2 : f32 to vector<16x1xf32>
    %7 = arith.mulf %2, %6 : vector<16x1xf32>
    %cst_3 = arith.constant 3.125000e-02 : f32
    %8 = vector.broadcast %cst_3 : f32 to vector<16x1xf32>
    %9 = arith.mulf %5, %8 : vector<16x1xf32>
    %10 = arith.mulf %7, %7 : vector<16x1xf32>
    %11 = arith.subf %9, %10 : vector<16x1xf32>
    %cst_4 = arith.constant 0.000000e+00 : f32
    %12 = vector.broadcast %cst_4 : f32 to vector<16x1xf32>
    %13 = arith.maximumf %11, %12 : vector<16x1xf32>
    %cst_5 = arith.constant 9.99999974E-6 : f32
    %14 = vector.broadcast %cst_5 : f32 to vector<16x1xf32>
    %15 = arith.addf %13, %14 : vector<16x1xf32>
    %16 = math.rsqrt %15 : vector<16x1xf32>
    %c0_6 = arith.constant 0 : index
    %c0_7 = arith.constant 0 : index
    %17 = vector.load %arg2[%c0_6, %c0_7] : memref<1x128xf32, #tpu.memory_space<vmem>>, vector<1x128xf32>
    %18 = vector.broadcast %7 : vector<16x1xf32> to vector<16x128xf32>
    %19 = arith.subf %0, %18 : vector<16x128xf32>
    %20 = vector.broadcast %16 : vector<16x1xf32> to vector<16x128xf32>
    %21 = arith.mulf %19, %20 : vector<16x128xf32>
    %22 = vector.broadcast %17 : vector<1x128xf32> to vector<16x128xf32>
    %23 = arith.mulf %21, %22 : vector<16x128xf32>
    %c0_8 = arith.constant 0 : index
    %c0_9 = arith.constant 0 : index
    %24 = vector.load %arg3[%c0_8, %c0_9] : memref<16x128xf32, #tpu.memory_space<vmem>>, vector<16x128xf32>
    tpu.vector_store %arg3[%c0_8, %c0_9], %23 {strides = array<i32>} : memref<16x128xf32, #tpu.memory_space<vmem>>, vector<16x128xf32>,
    return
  }
  func.func @transform_0(%arg0: i32) -> (i32, i32) {
    %c0_i32 = arith.constant 0 : i32
    %c0_i32_0 = arith.constant 0 : i32
    return %arg0, %c0_i32 : i32, i32
  }
  func.func @transform_1(%arg0: i32) -> (i32, i32) {
    %c0_i32 = arith.constant 0 : i32
    %c0_i32_0 = arith.constant 0 : i32
    %c0_i32_1 = arith.constant 0 : i32
    return %c0_i32, %c0_i32_0 : i32, i32
  }
  func.func @transform_2(%arg0: i32) -> (i32, i32) {
    %c0_i32 = arith.constant 0 : i32
    %c0_i32_0 = arith.constant 0 : i32
    return %arg0, %c0_i32 : i32, i32
  }
}

</mosaic_0001>

<llo_original>
// kernel: tpu_custom_call.1
$region0: #{tpu_custom_call.1}
  #allocation0 [shape = 'u32[]', space=smem, size = 0x4, offset = 0x4, fixed_abs, tag = 'smem constant byte address 0x4 - core index']
  #allocation1 [shape = 'u32[144,128]{1,0:T(1,128)}', space=vmem, size = 0x12000, scoped, tag = 'internal scratch']
  %s0 = inlined_call_operand.hbm [shape: f32[16,128], index: 0, kind: input, shape index: {}]
  %s1 = inlined_call_operand.vmem [shape: f32[1,128], index: 1, kind: input, shape index: {}]
  %s2 = inlined_call_operand.hbm [shape: f32[16,128], index: 2, kind: output, shape index: {}]
  %s3 = sld [smem:[#allocation0]]
  $region22: #{tpu_custom_call.1} parent=0
    _
  %s5 = ssub.s32 1, %s3
  %s6 = scalar_select 0, %s5, %s3
  $region1: #{tpu_custom_call.1} parent=0
    #allocation2 [shape = 'u8[8192]{0}', space=vmem, size = 0x2000, scoped, tag = 'input window, operand 0, single buffered']
    #allocation3 [shape = 's32[1]{0}', space=sflag, size = 0x4, scoped, tag = 'scoped memory for tpu_custom_call.1']
    #allocation4 [shape = 's32[1]{0}', space=sflag, size = 0x4, scoped, tag = 'scoped memory for tpu_custom_call.1']
    #allocation5 [shape = 'u8[8192]{0}', space=vmem, size = 0x2000, scoped, tag = 'output window, operand 0, single buffered']
    %7 = vsyncpa [#allocation3], 0
    %8 = vsyncpa [#allocation4], 0
    // Predicated region
    $region2: #{tpu_custom_call.1} parent=1 // pred_check
      _
    $region3: #{tpu_custom_call.1} parent=1 // pred_check_branch
      %10 = sbr.rel (0) target = $region5
    $region4: #{tpu_custom_call.1} parent=1 // pred_region
      %s12 = ssub.s32 256, 256
      %13 = vsyncadd [#allocation3], %s12
      %s14 = sshll.u32 [#allocation2], 4
      %s15 = int_to_ptr.vmem [resolvable:$true] %s14
      %20 = dma.hbm_to_vmem [thread:$0]  %s0, 256, %s15, [#allocation3], 128, 128, 8
    $region5: #{tpu_custom_call.1} parent=1 // pred_fallthru
      _
    // Predicated region
    $region6: #{tpu_custom_call.1} parent=1 // pred_check
      _
    $region7: #{tpu_custom_call.1} parent=1 // pred_check_branch
      %22 = sbr.rel (0) target = $region9
    $region8: #{tpu_custom_call.1} parent=1 // pred_region
      _
    $region9: #{tpu_custom_call.1} parent=1 // pred_fallthru
      _
    // Predicated region
    $region10: #{tpu_custom_call.1} parent=1 // pred_check
      _
    $region11: #{tpu_custom_call.1} parent=1 // pred_check_branch
      %24 = sbr.rel (0) target = $region13
    $region12: #{tpu_custom_call.1} parent=1 // pred_region
      %25 = dma.done [#allocation3], 256
    $region13: #{tpu_custom_call.1} parent=1 // pred_fallthru
      _
    %v26 = vld [vmem:[#allocation2] sm:$0xff]
    %v27 = vld [vmem:[#allocation2 + $0x8] sm:$0xff]
    %28 = vadd.xlane.f32.xlu0 %v26
    %v29 = vpop.xlane.xlu0 %28
    %30 = vadd.xlane.f32.xlu0 %v27
    %v31 = vpop.xlane.xlu0 %30
    %v32 = vmul.f32 %v26, %v26
    %v33 = vmul.f32 %v27, %v27
    %34 = vadd.xlane.f32.xlu0 %v32
    %v35 = vpop.xlane.xlu0 %34
    %36 = vadd.xlane.f32.xlu0 %v33
    %v37 = vpop.xlane.xlu0 %36
    %v38 = vmul.f32 %v29, 0.03125
    %v39 = vmul.f32 %v31, 0.03125
    %v40 = vmul.f32 %v35, 0.03125
    %v41 = vmul.f32 %v37, 0.03125
    %v42 = vmul.f32 %v38, %v38
    %v43 = vmul.f32 %v39, %v39
    %v44 = vsub.f32 %v40, %v42
    %v45 = vsub.f32 %v41, %v43
    %v46 = vmax.f32 %v44, 0.0
    %v47 = vmax.f32 %v45, 0.0
    %v48 = vadd.f32 %v46, 1e-05
    %v49 = vadd.f32 %v47, 1e-05
    %v50 = vrsqrt.pop %v48
    %v51 = vrsqrt.pop %v49
    %v52 = vld [vmem:[%s1] sm:$0x1]
    %v53 = vsub.f32 %v26, %v38
    %v54 = vsub.f32 %v27, %v39
    %v55 = vmul.f32 %v53, %v50
    %v56 = vmul.f32 %v54, %v51
    %v58 = vlaneseq
    %v59 = vshrl.u32 %v58, 7
    %v60 = vsub.s32 0, %v59
    %v61 = vrot.slane %v52, %v60
    %v63 = vmul.f32 %v55, %v61
    %v64 = vmul.f32 %v56, %v61
    %65 = vst [vmem:[#allocation5] sm:$0xff] %v63
    %66 = vst [vmem:[#allocation5 + $0x8] sm:$0xff] %v64
    // Predicated region
    $region14: #{tpu_custom_call.1} parent=1 // pred_check
      _
    $region15: #{tpu_custom_call.1} parent=1 // pred_check_branch
      %68 = sbr.rel (0) target = $region17
    $region16: #{tpu_custom_call.1} parent=1 // pred_region
      %s70 = ssub.s32 256, 256
      %71 = vsyncadd [#allocation4], %s70
      %s72 = sshll.u32 [#allocation5], 4
      %s73 = int_to_ptr.vmem [resolvable:$true] %s72
      %78 = dma.vmem_to_hbm [thread:$0]  %s73, 256, %s2, [#allocation4], 128, 128, 8
    $region17: #{tpu_custom_call.1} parent=1 // pred_fallthru
      _
    // Predicated region
    $region18: #{tpu_custom_call.1} parent=1 // pred_check
      _
    $region19: #{tpu_custom_call.1} parent=1 // pred_check_branch
      %80 = sbr.rel (0) target = $region21
    $region20: #{tpu_custom_call.1} parent=1 // pred_region
      %81 = dma.done [#allocation4], 256
    $region21: #{tpu_custom_call.1} parent=1 // pred_fallthru
      _
    %82 = vsyncpa [#allocation3], 1
    %83 = vsyncpa [#allocation4], 1

</llo_original>
